<compile_context>
chip_gen: v5e
topology: v5e:2x2
jax: 0.10.0
libtpu: 0.0.40
codegen_flags: <defaults>
</compile_context>

<pallas_src>
import math

import jax
import jax.numpy as jnp
from jax.experimental import pallas as pl
from jax.experimental.pallas import tpu as pltpu


def _cse_kernel(x_ref, w_ref, b_ref, o_ref):
    # x_ref : (TR, F)  rows = flattened (batch, channel) pairs, input dtype
    # w_ref : (1,  F)  attention_fc weight, input dtype (resident)
    # b_ref : (TR, 1)  per-row bias, f32 (resident when TR % C == 0)
    # o_ref : (TR, F)
    x = x_ref[...]
    w = w_ref[...]

    # Gate path: VPU multiply in the input dtype, lane (XLU) reduction with f32
    # accumulation -> (TR, 1).  No (TR, F) f32 temp is materialized.
    att = jnp.sum(x * w, axis=-1, keepdims=True, dtype=jnp.float32) + b_ref[...]
    gate = jax.nn.sigmoid(att)                       # (TR, 1) f32, EUP

    o_ref[...] = (x * gate.astype(x.dtype)).astype(o_ref.dtype)


def _vmem_budget():
    """Generation-aware (vmem_limit_bytes, per-x-tile byte target)."""
    try:
        cap = int(pltpu.get_tpu_info().vmem_capacity_bytes)
    except Exception:
        cap = 64 << 20              # conservative fallback: v7x per-TensorCore VMEM
    limit = max((cap * 3) // 4, 32 << 20)   # leave headroom for compiler scratch
    # x + out double-buffered (~4 tiles) plus lane-padded (TR,1) f32 temps -> /12.
    tile_target = max(2 << 20, limit // 12)
    return int(limit), int(tile_target)


def _choose_tile_rows(rows, feat_pad, itemsize, target_bytes):
    """Largest row tile (multiple of 8) with TR*F*itemsize <= target_bytes."""
    per_row = max(1, feat_pad * itemsize)
    tr = max(8, (target_bytes // per_row) // 8 * 8)
    tr = min(tr, ((rows + 7) // 8) * 8)
    # Guarantee >= 2 grid steps when there is enough work (v7x has 2 TensorCores).
    if rows >= 16 and tr >= rows:
        tr = max(8, ((rows // 2) // 8) * 8)
    return int(tr)


def cse_block(inputs, weight, bias):
    """cSEBlock forward.

    inputs : (B, C, H, W)
    weight : (1, F)    F = H*W, attention_fc.weight (nn.Linear(feat, 1, bias=False))
    bias   : (1, C, 1) learnable per-channel bias
    """
    B, C, H, W = inputs.shape
    F = H * W
    rows = B * C
    itemsize = jnp.dtype(inputs.dtype).itemsize

    x = inputs.reshape(rows, F)
    w = weight.astype(inputs.dtype)

    # Pad F to a multiple of 128 so output stores are lane-dense (unmasked vst).
    # Zero padding leaves the dot product unchanged; padded columns are sliced off.
    f_pad = ((F + 127) // 128) * 128
    if f_pad != F:
        x = jnp.pad(x, ((0, 0), (0, f_pad - F)))
        w = jnp.pad(w, ((0, 0), (0, f_pad - F)))

    vmem_limit, tile_target = _vmem_budget()
    tr = _choose_tile_rows(rows, f_pad, itemsize, tile_target)

    # Bias handling: if TR can be made a multiple of C, the per-row bias pattern is
    # identical in every tile -> one small resident block, no bias DMA stream.
    bias_c = bias.reshape(C).astype(jnp.float32)
    if tr % C != 0 and C <= tr:
        g = (8 * C) // math.gcd(8, C)          # lcm(8, C); a multiple of 8
        if g <= tr:
            tr = (tr // g) * g
    if tr % C == 0:
        b_arr = jnp.tile(bias_c.reshape(C, 1), (tr // C, 1))          # (tr, 1)
        b_spec = pl.BlockSpec((tr, 1), lambda i: (0, 0))              # resident
    else:
        b_arr = jnp.broadcast_to(bias_c.reshape(1, C), (B, C)).reshape(rows, 1)
        b_spec = pl.BlockSpec((tr, 1), lambda i: (i, 0))              # streamed

    grid = (pl.cdiv(rows, tr),)

    cost = pl.CostEstimate(
        flops=3 * rows * f_pad,
        transcendentals=rows,
        bytes_accessed=2 * rows * f_pad * itemsize + f_pad * itemsize + rows * 4,
    )

    out_flat = pl.pallas_call(
        _cse_kernel,
        out_shape=jax.ShapeDtypeStruct((rows, f_pad), inputs.dtype),
        grid_spec=pltpu.PrefetchScalarGridSpec(
            num_scalar_prefetch=0,
            grid=grid,
            in_specs=[
                pl.BlockSpec((tr, f_pad), lambda i: (i, 0)),   # x rows (streamed)
                pl.BlockSpec((1, f_pad), lambda i: (0, 0)),    # weight (resident)
                b_spec,                                        # per-row bias
            ],
            out_specs=pl.BlockSpec((tr, f_pad), lambda i: (i, 0)),
        ),
        compiler_params=pltpu.CompilerParams(
            dimension_semantics=("parallel",),
            vmem_limit_bytes=vmem_limit,
        ),
        cost_estimate=cost,
    )(x, w, b_arr)

    if f_pad != F:
        out_flat = out_flat[:, :F]
    return out_flat.reshape(B, C, H, W)


def _reference(inputs, weight, bias):
    B, C, H, W = inputs.shape
    x = inputs.reshape(B, C, H * W)
    att = jnp.einsum("bcf,of->bco", x, weight) + bias          # (B, C, 1)
    gate = jax.nn.sigmoid(att).reshape(B, C, 1, 1)
    return inputs * gate


def _run_case(seed, B, C, H, W, zero_bias):
    F = H * W
    k_in, k_w, k_b = jax.random.split(jax.random.PRNGKey(seed), 3)
    inputs = jax.random.normal(k_in, (B, C, H, W), dtype=jnp.float32)
    weight = jax.random.normal(k_w, (1, F), dtype=jnp.float32) * (1.0 / F ** 0.5)
    if zero_bias:
        bias = jnp.zeros((1, C, 1), dtype=jnp.float32)
    else:
        bias = jax.random.normal(k_b, (1, C, 1), dtype=jnp.float32) * 0.1

    out = jax.block_until_ready(cse_block(inputs, weight, bias))
    ref = _reference(inputs, weight, bias)
    assert out.shape == (B, C, H, W)
    assert jnp.allclose(out, ref, atol=1e-5, rtol=1e-5), (
        f"mismatch vs reference for shape {(B, C, H, W)}")


if __name__ == "__main__":
    # Primary shape implied by the module (zero-initialized bias, F % 128 == 0).
    _run_case(0, B=2, C=4, H=16, W=16, zero_bias=True)
    # Partial trailing block: B*C not a multiple of 8, F not a multiple of 128.
    _run_case(0, B=3, C=5, H=12, W=12, zero_bias=False)
    # Multi-step grid with resident non-zero bias (exercises the >=2-step split).
    _run_case(0, B=4, C=8, H=16, W=16, zero_bias=False)

    print("KERNEL_OK")
</pallas_src>

<mosaic_0001>
module attributes {stable_mosaic.version = 11 : i64} {
  func.func @_cse_kernel(%arg0: i32, %arg1: memref<8x256xf32, #tpu.memory_space<vmem>>, %arg2: memref<1x256xf32, #tpu.memory_space<vmem>>, %arg3: memref<8x1xf32, #tpu.memory_space<vmem>>, %arg4: memref<8x256xf32, #tpu.memory_space<vmem>>) attributes {dimension_semantics = [#tpu.dimension_semantics<parallel>], iteration_bounds = array<i64: 1>, scalar_prefetch = 0 : i64, scratch_operands = 0 : i64, tpu.core_type = #tpu.core_type<tc>, window_params = [{transform_indices = @transform_0, window_bounds = array<i64: 8, 256>}, {pipeline_mode = #tpu.pipeline_mode<synchronous>, transform_indices = @transform_1, window_bounds = array<i64: 1, 256>}, {pipeline_mode = #tpu.pipeline_mode<synchronous>, transform_indices = @transform_2, window_bounds = array<i64: 8, 1>}, {transform_indices = @transform_3, window_bounds = array<i64: 8, 256>}]} {
    %c0 = arith.constant 0 : index
    %c0_0 = arith.constant 0 : index
    %0 = vector.load %arg1[%c0, %c0_0] : memref<8x256xf32, #tpu.memory_space<vmem>>, vector<8x256xf32>
    %c0_1 = arith.constant 0 : index
    %c0_2 = arith.constant 0 : index
    %1 = vector.load %arg2[%c0_1, %c0_2] : memref<1x256xf32, #tpu.memory_space<vmem>>, vector<1x256xf32>
    %2 = vector.broadcast %1 : vector<1x256xf32> to vector<8x256xf32>
    %3 = arith.mulf %0, %2 : vector<8x256xf32>
    %cst = arith.constant dense<0.000000e+00> : vector<8xf32>
    %4 = vector.multi_reduction <add>, %3, %cst [1] : vector<8x256xf32> to vector<8xf32>
    %5 = vector.shape_cast %4 : vector<8xf32> to vector<8x1xf32>
    %c0_3 = arith.constant 0 : index
    %c0_4 = arith.constant 0 : index
    %6 = vector.load %arg3[%c0_3, %c0_4] : memref<8x1xf32, #tpu.memory_space<vmem>>, vector<8x1xf32>
    %7 = arith.addf %5, %6 : vector<8x1xf32>
    %8 = arith.negf %7 : vector<8x1xf32>
    %9 = math.exp %8 : vector<8x1xf32>
    %cst_5 = arith.constant 1.000000e+00 : f32
    %10 = vector.broadcast %cst_5 : f32 to vector<8x1xf32>
    %11 = arith.addf %10, %9 : vector<8x1xf32>
    %12 = arith.divf %10, %11 : vector<8x1xf32>
    %13 = vector.broadcast %12 : vector<8x1xf32> to vector<8x256xf32>
    %14 = arith.mulf %0, %13 : vector<8x256xf32>
    %c0_6 = arith.constant 0 : index
    %c0_7 = arith.constant 0 : index
    %15 = vector.load %arg4[%c0_6, %c0_7] : memref<8x256xf32, #tpu.memory_space<vmem>>, vector<8x256xf32>
    tpu.vector_store %arg4[%c0_6, %c0_7], %14 {strides = array<i32>} : memref<8x256xf32, #tpu.memory_space<vmem>>, vector<8x256xf32>,
    return
  }
  func.func @transform_0(%arg0: i32) -> (i32, i32) {
    %c0_i32 = arith.constant 0 : i32
    %c0_i32_0 = arith.constant 0 : i32
    return %arg0, %c0_i32 : i32, i32
  }
  func.func @transform_1(%arg0: i32) -> (i32, i32) {
    %c0_i32 = arith.constant 0 : i32
    %c0_i32_0 = arith.constant 0 : i32
    %c0_i32_1 = arith.constant 0 : i32
    return %c0_i32, %c0_i32_0 : i32, i32
  }
  func.func @transform_2(%arg0: i32) -> (i32, i32) {
    %c0_i32 = arith.constant 0 : i32
    %c0_i32_0 = arith.constant 0 : i32
    %c0_i32_1 = arith.constant 0 : i32
    return %c0_i32, %c0_i32_0 : i32, i32
  }
  func.func @transform_3(%arg0: i32) -> (i32, i32) {
    %c0_i32 = arith.constant 0 : i32
    %c0_i32_0 = arith.constant 0 : i32
    return %arg0, %c0_i32 : i32, i32
  }
}

</mosaic_0001>

<llo_original>
// kernel: tpu_custom_call.1
$region0: #{tpu_custom_call.1}
  #allocation0 [shape = 'u32[]', space=smem, size = 0x4, offset = 0x4, fixed_abs, tag = 'smem constant byte address 0x4 - core index']
  #allocation1 [shape = 'u32[72,128]{1,0:T(1,128)}', space=vmem, size = 0x9000, scoped, tag = 'internal scratch']
  %s0 = inlined_call_operand.hbm [shape: f32[8,256], index: 0, kind: input, shape index: {}]
  %s1 = inlined_call_operand.vmem [shape: f32[1,256], index: 1, kind: input, shape index: {}]
  %s2 = inlined_call_operand.vmem [shape: f32[8,1], index: 2, kind: input, shape index: {}]
  %s3 = inlined_call_operand.hbm [shape: f32[8,256], index: 3, kind: output, shape index: {}]
  %s4 = sld [smem:[#allocation0]]
  $region26: #{tpu_custom_call.1} parent=0
    _
  %s6 = ssub.s32 1, %s4
  %s7 = scalar_select 0, %s6, %s4
  $region1: #{tpu_custom_call.1} parent=0
    #allocation2 [shape = 'u8[8192]{0}', space=vmem, size = 0x2000, scoped, tag = 'input window, operand 0, single buffered']
    #allocation3 [shape = 's32[1]{0}', space=sflag, size = 0x4, scoped, tag = 'scoped memory for tpu_custom_call.1']
    #allocation4 [shape = 's32[1]{0}', space=sflag, size = 0x4, scoped, tag = 'scoped memory for tpu_custom_call.1']
    #allocation5 [shape = 'u8[8192]{0}', space=vmem, size = 0x2000, scoped, tag = 'output window, operand 0, single buffered']
    %8 = vsyncpa [#allocation3], 0
    %9 = vsyncpa [#allocation4], 0
    // Predicated region
    $region2: #{tpu_custom_call.1} parent=1 // pred_check
      _
    $region3: #{tpu_custom_call.1} parent=1 // pred_check_branch
      %11 = sbr.rel (0) target = $region5
    $region4: #{tpu_custom_call.1} parent=1 // pred_region
      %13 = vsyncadd [#allocation3], 0
      %s15 = sshll.u32 %s0, 4
      %s16 = int_to_ptr.hbm [resolvable:$true] %s15
      %s17 = sshll.u32 [#allocation2], 4
      %s18 = int_to_ptr.vmem [resolvable:$true] %s17
      %20 = dma.hbm_to_vmem [thread:$0]  %s16, 256, %s18, [#allocation3]
    $region5: #{tpu_custom_call.1} parent=1 // pred_fallthru
      _
    // Predicated region
    $region6: #{tpu_custom_call.1} parent=1 // pred_check
      _
    $region7: #{tpu_custom_call.1} parent=1 // pred_check_branch
      %22 = sbr.rel (0) target = $region9
    $region8: #{tpu_custom_call.1} parent=1 // pred_region
      _
    $region9: #{tpu_custom_call.1} parent=1 // pred_fallthru
      _
    // Predicated region
    $region10: #{tpu_custom_call.1} parent=1 // pred_check
      _
    $region11: #{tpu_custom_call.1} parent=1 // pred_check_branch
      %24 = sbr.rel (0) target = $region13
    $region12: #{tpu_custom_call.1} parent=1 // pred_region
      _
    $region13: #{tpu_custom_call.1} parent=1 // pred_fallthru
      _
    // Predicated region
    $region14: #{tpu_custom_call.1} parent=1 // pred_check
      _
    $region15: #{tpu_custom_call.1} parent=1 // pred_check_branch
      %26 = sbr.rel (0) target = $region17
    $region16: #{tpu_custom_call.1} parent=1 // pred_region
      %28 = dma.done [#allocation3], 256
    $region17: #{tpu_custom_call.1} parent=1 // pred_fallthru
      _
    %v29 = vld [vmem:[#allocation2] sm:$0xff]
    %v30 = vld [vmem:[#allocation2 + $0x8] sm:$0xff]
    %v31 = vld [vmem:[%s1] sm:$0x3]
    %v33 = vperm.slane %v31, 0
    %v34 = vperm.slane %v31, 1
    %v37 = vmul.f32 %v29, %v33
    %v38 = vmul.f32 %v30, %v34
    %v39 = vadd.f32 %v37, %v38
    %40 = vadd.xlane.f32.xlu0 %v39
    %v41 = vpop.xlane.xlu0 %40
    %v42 = vld [vmem:[%s2] sm:$0xff]
    %v43 = vadd.f32 %v41, %v42
    %v44 = vxor.u32 %v43, 2147483648
    %v45 = vmul.f32 %v44, 1.442695
    %v46 = vpow.pop %v45
    %v47 = vadd.f32 %v46, 1.0
    %v48 = vrcp.pop %v47
    %v49 = vmul.f32 %v47, %v48
    %v50 = vsub.f32 1.0, %v49
    %v51 = vmul.f32 %v48, %v50
    %v52 = vadd.f32 %v48, %v51
    %vm53 = vweird.f32 %v47
    %vm54 = vweird.f32 %v48
    %vm55 = vmor %vm53, %vm54
    %v56 = vsel %vm55, %v48, %v52
    %v57 = vand.u32 2147483647, %v47
    %vm58 = vcmp.eq.f32.partialorder %v57, 8.507059e+37
    %v59 = vand.u32 %v47, 2147483648
    %v60 = vor.u32 1.1754944e-38, %v59
    %v61 = vsel %vm58, %v60, %v56
    %v62 = vmul.f32 1.0, %v61
    %64 = vset.pattern.permute.xlu0 0
    %65 = vperm.xlu0 %64, %v62
    %v66 = vpop.permute.xlu0 %65
    %v68 = vmul.f32 %v29, %v66
    %v69 = vmul.f32 %v30, %v66
    %70 = vst [vmem:[#allocation5] sm:$0xff] %v68
    %71 = vst [vmem:[#allocation5 + $0x8] sm:$0xff] %v69
    // Predicated region
    $region18: #{tpu_custom_call.1} parent=1 // pred_check
      _
    $region19: #{tpu_custom_call.1} parent=1 // pred_check_branch
      %73 = sbr.rel (0) target = $region21
    $region20: #{tpu_custom_call.1} parent=1 // pred_region
      %75 = vsyncadd [#allocation4], 0
      %s77 = sshll.u32 [#allocation5], 4
      %s78 = int_to_ptr.vmem [resolvable:$true] %s77
      %s79 = sshll.u32 %s3, 4
      %s80 = int_to_ptr.hbm [resolvable:$true] %s79
      %82 = dma.vmem_to_hbm [thread:$0]  %s78, 256, %s80, [#allocation4]
    $region21: #{tpu_custom_call.1} parent=1 // pred_fallthru
      _
    // Predicated region
    $region22: #{tpu_custom_call.1} parent=1 // pred_check
      _
    $region23: #{tpu_custom_call.1} parent=1 // pred_check_branch
      %84 = sbr.rel (0) target = $region25
    $region24: #{tpu_custom_call.1} parent=1 // pred_region
      %86 = dma.done [#allocation4], 256
    $region25: #{tpu_custom_call.1} parent=1 // pred_fallthru
      _
    %87 = vsyncpa [#allocation3], 1
    %88 = vsyncpa [#allocation4], 1

</llo_original>
